<compile_context>
chip_gen: v6e
topology: v6e:2x2x1
jax: 0.10.0
libtpu: 0.0.40
codegen_flags: <defaults>
</compile_context>

<pallas_src>
import functools
import jax
import jax.numpy as jnp
from jax.experimental import pallas as pl
from jax.experimental.pallas import tpu as pltpu


# ----------------------------- Pallas kernel --------------------------------

def _conv_lf_kernel(w_ref, hist_ref, out_ref):
    # out_T[j, r] = sum_m W_T[j, m] * hist_T[m, r]
    #             == valid 1-D convolution of hist[r, :] with the (constant) LF.
    out_ref[...] = jnp.dot(w_ref[...], hist_ref[...],
                           preferred_element_type=jnp.float32)


def _lf_toeplitz_t(lf_number, n_mu):
    """W_T[j, m] = lf[j + n_mu - 1 - m]  -> shape (n_out, n_mu)."""
    n_lf = lf_number.shape[0]
    n_out = n_lf - n_mu + 1
    lf = lf_number.astype(jnp.float32)
    idx = jnp.arange(n_out)[:, None] + (n_mu - 1) - jnp.arange(n_mu)[None, :]
    return lf[idx]


def _convolve_mu_major(hist_t, lf_number):
    """hist_t: (n_mu, R) float32, mu-major.  Returns (n_out, R) float32."""
    L, R = hist_t.shape
    w_t = _lf_toeplitz_t(lf_number, L)          # (n_out, L) constant
    n_out = w_t.shape[0]

    # Pad R (lane axis) to a multiple of 128 for unmasked full-width vld/vst.
    R_pad = max(128, ((R + 127) // 128) * 128)
    if R_pad != R:
        hist_t = jnp.pad(hist_t, ((0, 0), (0, R_pad - R)))

    out_t = pl.pallas_call(
        _conv_lf_kernel,
        out_shape=jax.ShapeDtypeStruct((n_out, R_pad), jnp.float32),
        # Whole-array blocks resident in VMEM; single invocation, no pipelining.
        in_specs=[pl.BlockSpec(memory_space=pltpu.MemorySpace.VMEM),
                  pl.BlockSpec(memory_space=pltpu.MemorySpace.VMEM)],
        out_specs=pl.BlockSpec(memory_space=pltpu.MemorySpace.VMEM),
    )(w_t, hist_t)
    return out_t[:, :R]


def convolve_distance_modulus_with_lf(histogram, lf_number, distance_mod_dim=-1):
    """Pallas equivalent of astro_dynamo.targets.convolve_distance_modulus_with_lf."""
    if distance_mod_dim != -1:
        histogram = jnp.swapaxes(histogram, distance_mod_dim, -1)
    lead = histogram.shape[:-1]
    L = histogram.shape[-1]
    R = 1
    for d in lead:
        R *= int(d)
    # Present a mu-major, lane-dense (L, R) slab to the kernel.
    hist_t = jnp.moveaxis(histogram.astype(jnp.float32), -1, 0).reshape(L, R)
    out_t = _convolve_mu_major(hist_t, lf_number)        # (n_out, R)
    out = out_t.T.reshape(tuple(lead) + (-1,))
    if distance_mod_dim != -1:
        out = jnp.swapaxes(out, distance_mod_dim, -1)
    return out


# --------------------------- PositionMagnitude ------------------------------

class PositionMagnitude:
    """JAX/Pallas port of astro_dynamo.targets.PositionMagnitude."""

    def __init__(self, luminosity_function,
                 l_range=(-90.0, 90.0), n_l=90,
                 b_range=(-12.0, 12.0), n_b=20,
                 mag_range=(11.0, 12.0), n_mag=6):  # 6 == int(1/0.2 + 1), from integers
        lf_mag = jnp.asarray(luminosity_function['mag'], jnp.float32)
        self.luminosity_function = jnp.asarray(luminosity_function['number'], jnp.float32)
        first_mu_bin = float(mag_range[1]) - float(lf_mag[-1])
        last_mu_bin = float(mag_range[0]) - float(lf_mag[0])
        n_mu_bins = int(lf_mag.shape[0]) - int(n_mag) + 1
        self.n = (int(n_l), int(n_b), int(n_mu_bins))
        self.grid_lo = jnp.array([l_range[0], b_range[0], first_mu_bin], jnp.float32)
        self.grid_hi = jnp.array([l_range[1], b_range[1], last_mu_bin], jnp.float32)
        self.apparent_mags = jnp.linspace(mag_range[0], mag_range[1], n_mag)

    # TODO(synk): astro_dynamo's Grid class source was not provided; 'nearest'
    # binning is approximated as nearest-cell-center (centers = linspace(lo, hi, n)),
    # and the data-dependent particle scatter-add has no clean Pallas TPU
    # equivalent, so it stays in plain JAX (.at[].add).  The histogram is built
    # mu-major so the Pallas convolution consumes a lane-dense (n_mu, n_l*n_b)
    # slab with no transpose.
    def grid_data_nearest_mu_major(self, l_b_mu, weights):
        n_l, n_b, n_mu = self.n
        n = jnp.array(self.n, jnp.float32)
        dx = (self.grid_hi - self.grid_lo) / (n - 1.0)
        idx_f = jnp.round((l_b_mu.astype(jnp.float32) - self.grid_lo) / dx)
        in_range = jnp.all((idx_f >= 0.0) & (idx_f <= (n - 1.0)), axis=-1)
        idx = jnp.clip(idx_f.astype(jnp.int32), 0,
                       jnp.array(self.n, jnp.int32) - 1)
        w = jnp.where(in_range, weights.astype(jnp.float32), 0.0)
        # mu-major flat index: mu on the leading (sublane) axis of the histogram.
        flat = (idx[:, 2] * n_l + idx[:, 0]) * n_b + idx[:, 1]
        hist = jnp.zeros(n_mu * n_l * n_b, jnp.float32).at[flat].add(w)
        return hist.reshape(n_mu, n_l * n_b)

    @functools.partial(jax.jit, static_argnums=0)
    def forward(self, l_b_mu, masses):
        n_l, n_b, _ = self.n
        hist_t = self.grid_data_nearest_mu_major(l_b_mu, masses)      # (n_mu, R)
        out_t = _convolve_mu_major(hist_t, self.luminosity_function)  # (n_mag, R)
        return out_t.T.reshape(n_l, n_b, -1)                          # (n_l, n_b, n_mag)


# --------------------------------- main --------------------------------------

if __name__ == "__main__":
    key = jax.random.PRNGKey(0)
    k_lf, k_pos, k_mass = jax.random.split(key, 3)

    # Small, module-consistent setup:
    #   n_mag = 6 (mag_range=(11,12), 0.2 spacing), LF with 21 bins spaced 0.2
    #   => n_mu_bins = 21 - 6 + 1 = 16; sky grid n_l=32, n_b=16 (R = 512).
    n_mag = 6
    lf_mag = jnp.linspace(-2.0, 2.0, 21)
    lf_number = jax.random.uniform(k_lf, (21,), jnp.float32, 0.1, 1.0)
    luminosity_function = {'mag': lf_mag, 'number': lf_number}

    target = PositionMagnitude(luminosity_function,
                               l_range=(-90.0, 90.0), n_l=32,
                               b_range=(-12.0, 12.0), n_b=16,
                               mag_range=(11.0, 12.0), n_mag=n_mag)

    # Synthetic "model": particle (l, b, mu) and masses.
    N = 1024
    lo = jnp.array([-90.0, -12.0, 10.0])
    hi = jnp.array([90.0, 12.0, 13.0])
    l_b_mu = lo + (hi - lo) * jax.random.uniform(k_pos, (N, 3), jnp.float32)
    masses = jax.random.uniform(k_mass, (N,), jnp.float32, 0.5, 1.5)

    out = target.forward(l_b_mu, masses)
    out = jax.block_until_ready(out)
    assert out.shape == (32, 16, n_mag), out.shape

    # Reference check of the convolution (pure JAX) against the Pallas kernel.
    hist_t = target.grid_data_nearest_mu_major(l_b_mu, masses)        # (L, R)
    L = hist_t.shape[0]
    W = lf_number[jnp.arange(n_mag)[None, :] + (L - 1) - jnp.arange(L)[:, None]]  # (L, n_mag)
    ref = (hist_t.T @ W).reshape(32, 16, n_mag)
    assert jnp.allclose(out, ref, atol=1e-4, rtol=1e-4)

    # Also check the public API with a standard-layout (n_l, n_b, n_mu) histogram.
    hist_std = hist_t.reshape(L, 32, 16).transpose(1, 2, 0)
    out2 = jax.block_until_ready(
        convolve_distance_modulus_with_lf(hist_std, lf_number))
    assert jnp.allclose(out2, ref, atol=1e-4, rtol=1e-4)

    print("KERNEL_OK")
</pallas_src>

<mosaic_0001>
module attributes {stable_mosaic.version = 11 : i64} {
  func.func private @main(%arg0: i32) attributes {dimension_semantics = [#tpu.dimension_semantics<core_parallel>], iteration_bounds = array<i64: 2>, tpu.core_type = #tpu.core_type<sc_scalar_subcore>, window_params = []} {
    return
  }
}

module attributes {stable_mosaic.version = 11 : i64} {
  func.func private @main(%arg0: i32) attributes {dimension_semantics = [#tpu.dimension_semantics<core_parallel>], iteration_bounds = array<i64: 2>, tpu.core_type = #tpu.core_type<sc_scalar_subcore>, window_params = []} {
    return
  }
}

module attributes {stable_mosaic.version = 11 : i64} {
  func.func @_conv_lf_kernel(%arg0: memref<6x16xf32, #tpu.memory_space<vmem>>, %arg1: memref<16x512xf32, #tpu.memory_space<vmem>>, %arg2: memref<6x512xf32, #tpu.memory_space<vmem>>) attributes {dimension_semantics = [], scalar_prefetch = 0 : i64, scratch_operands = 0 : i64, tpu.core_type = #tpu.core_type<tc>} {
    %c0 = arith.constant 0 : index
    %c0_0 = arith.constant 0 : index
    %0 = vector.load %arg0[%c0, %c0_0] : memref<6x16xf32, #tpu.memory_space<vmem>>, vector<6x16xf32>
    %c0_1 = arith.constant 0 : index
    %c0_2 = arith.constant 0 : index
    %1 = vector.load %arg1[%c0_1, %c0_2] : memref<16x512xf32, #tpu.memory_space<vmem>>, vector<16x512xf32>
    %cst = arith.constant dense<0.000000e+00> : vector<6x512xf32>
    %2 = tpu.matmul %0, %1, %cst {dimension_numbers = #tpu.dot_dimension_numbers<[1], [0], [0], [1], [0, 0, 1, 1], [], []>} : vector<6x16xf32>, vector<16x512xf32>, vector<6x512xf32> -> vector<6x512xf32>
    %c0_3 = arith.constant 0 : index
    %c0_4 = arith.constant 0 : index
    %3 = vector.load %arg2[%c0_3, %c0_4] : memref<6x512xf32, #tpu.memory_space<vmem>>, vector<6x512xf32>
    tpu.vector_store %arg2[%c0_3, %c0_4], %2 {strides = array<i32>} : memref<6x512xf32, #tpu.memory_space<vmem>>, vector<6x512xf32>,
    return
  }
}

</mosaic_0001>

<llo_original>
// kernel: forward.1
$region0: #{forward.1}
  #allocation0 [shape = 'u32[]', space=smem, size = 0x4, offset = 0x4, fixed_abs, tag = 'smem constant byte address 0x4 - core index']
  #allocation1 [shape = 'u32[144,128]{1,0:T(1,128)}', space=vmem, size = 0x12000, scoped, tag = 'internal scratch']
  %s0 = inlined_call_operand.vmem [shape: f32[6,16], index: 0, kind: input, shape index: {}]
  %s1 = inlined_call_operand.vmem [shape: f32[16,512], index: 1, kind: input, shape index: {}]
  %s2 = inlined_call_operand.vmem [shape: f32[6,512], index: 2, kind: output, shape index: {}]
  %s3 = sld [smem:[#allocation0]]
  $region18: #{forward.1} parent=0
    _
  %s5 = ssub.s32 1, %s3
  %s6 = scalar_select 0, %s5, %s3
  // Predicated region
  $region2: #{forward.1} parent=0 // pred_check
    _
  $region3: #{forward.1} parent=0 // pred_check_branch
    %8 = sbr.rel (0) target = $region5
  $region4: #{forward.1} parent=0 // pred_region
    _
  $region5: #{forward.1} parent=0 // pred_fallthru
    _
  // Predicated region
  $region6: #{forward.1} parent=0 // pred_check
    _
  $region7: #{forward.1} parent=0 // pred_check_branch
    %10 = sbr.rel (0) target = $region9
  $region8: #{forward.1} parent=0 // pred_region
    _
  $region9: #{forward.1} parent=0 // pred_fallthru
    _
  %v11 = vld [vmem:[%s0] sm:$0x3f]
  %v12 = vld [vmem:[%s1] sm:$0xff]
  %v13 = vld [vmem:[%s1 + $0x8] sm:$0xff]
  %v14 = vld [vmem:[%s1 + $0x10] sm:$0xff]
  %v15 = vld [vmem:[%s1 + $0x18] sm:$0xff]
  %v16 = vld [vmem:[%s1 + $0x20] sm:$0xff]
  %v17 = vld [vmem:[%s1 + $0x28] sm:$0xff]
  %v18 = vld [vmem:[%s1 + $0x30] sm:$0xff]
  %v19 = vld [vmem:[%s1 + $0x38] sm:$0xff]
  %vm20 = vcmask 130048
  %v22 = vsel %vm20, %v11, 0
  %24 = vmatprep.subr.mxu0 0.0
  %25 = vmatpush1.msra.mxu0 0.0
  %26 = vmatprep.subr.mxu0 0.0
  %27 = vmatpush1.msra.mxu0 0.0
  %28 = vmatprep.subr.mxu0 0.0
  %29 = vmatpush1.msra.mxu0 0.0
  %30 = vmatprep.subr.mxu0 0.0
  %31 = vmatpush1.msra.mxu0 0.0
  %32 = vmatprep.subr.mxu0 0.0
  %33 = vmatpush1.msra.mxu0 0.0
  %34 = vmatprep.subr.mxu0 0.0
  %35 = vmatpush1.msra.mxu0 0.0
  %36 = vmatprep.subr.mxu0 0.0
  %37 = vmatpush1.msra.mxu0 0.0
  %38 = vmatprep.subr.mxu0 0.0
  %39 = vmatpush1.msra.mxu0 0.0
  %40 = vmatprep.subr.mxu0 0.0
  %41 = vmatpush1.msra.mxu0 0.0
  %42 = vmatprep.subr.mxu0 0.0
  %43 = vmatpush1.msra.mxu0 0.0
  %44 = vmatprep.subr.mxu0 0.0
  %45 = vmatpush1.msra.mxu0 0.0
  %46 = vmatprep.subr.mxu0 0.0
  %47 = vmatpush1.msra.mxu0 0.0
  %48 = vmatprep.subr.mxu0 0.0
  %49 = vmatpush1.msra.mxu0 0.0
  %50 = vmatprep.subr.mxu0 0.0
  %51 = vmatpush1.msra.mxu0 0.0
  %52 = vmatprep.subr.mxu0 %v17
  %53 = vmatpush1.msra.mxu0 %v16
  %54 = vmatprep.subr.mxu0 %v13
  %55 = vmatpush1.msra.mxu0 %v12
  %56 = vmatprep.subr.mxu0 0.0
  %57 = vmatpush2.msra.mxu0 0.0
  %58 = vmatprep.subr.mxu0 0.0
  %59 = vmatpush2.msra.mxu0 0.0
  %60 = vmatprep.subr.mxu0 0.0
  %61 = vmatpush2.msra.mxu0 0.0
  %62 = vmatprep.subr.mxu0 0.0
  %63 = vmatpush2.msra.mxu0 0.0
  %64 = vmatprep.subr.mxu0 0.0
  %65 = vmatpush2.msra.mxu0 0.0
  %66 = vmatprep.subr.mxu0 0.0
  %67 = vmatpush2.msra.mxu0 0.0
  %68 = vmatprep.subr.mxu0 0.0
  %69 = vmatpush2.msra.mxu0 0.0
  %70 = vmatprep.subr.mxu0 0.0
  %71 = vmatpush2.msra.mxu0 0.0
  %72 = vmatprep.subr.mxu0 0.0
  %73 = vmatpush2.msra.mxu0 0.0
  %74 = vmatprep.subr.mxu0 0.0
  %75 = vmatpush2.msra.mxu0 0.0
  %76 = vmatprep.subr.mxu0 0.0
  %77 = vmatpush2.msra.mxu0 0.0
  %78 = vmatprep.subr.mxu0 0.0
  %79 = vmatpush2.msra.mxu0 0.0
  %80 = vmatprep.subr.mxu0 0.0
  %81 = vmatpush2.msra.mxu0 0.0
  %82 = vmatprep.subr.mxu0 0.0
  %83 = vmatpush2.msra.mxu0 0.0
  %84 = vmatprep.subr.mxu0 0.0
  %85 = vmatpush2.msra.mxu0 0.0
  %86 = vmatprep.subr.mxu0 0.0
  %87 = vmatpush2.msra.mxu0 0.0
  %88 = vmatprep.mubr.f32.mxu0 0.0
  %89 = vmatmul.mubr.f32.gmra.mxu0 %v22
  %v90 = vpop.f32.mrf.mxu0
  %v91 = vadd.f32 0.0, %v90
  %v92 = vpop.f32.mrf.mxu0
  %v93 = vadd.f32 0.0, %v92
  %94 = vdwg.mxu0
  %95 = vmatprep.subr.mxu0 0.0
  %96 = vmatpush1.msra.mxu0 0.0
  %97 = vmatprep.subr.mxu0 0.0
  %98 = vmatpush1.msra.mxu0 0.0
  %99 = vmatprep.subr.mxu0 0.0
  %100 = vmatpush1.msra.mxu0 0.0
  %101 = vmatprep.subr.mxu0 0.0
  %102 = vmatpush1.msra.mxu0 0.0
  %103 = vmatprep.subr.mxu0 0.0
  %104 = vmatpush1.msra.mxu0 0.0
  %105 = vmatprep.subr.mxu0 0.0
  %106 = vmatpush1.msra.mxu0 0.0
  %107 = vmatprep.subr.mxu0 0.0
  %108 = vmatpush1.msra.mxu0 0.0
  %109 = vmatprep.subr.mxu0 0.0
  %110 = vmatpush1.msra.mxu0 0.0
  %111 = vmatprep.subr.mxu0 0.0
  %112 = vmatpush1.msra.mxu0 0.0
  %113 = vmatprep.subr.mxu0 0.0
  %114 = vmatpush1.msra.mxu0 0.0
  %115 = vmatprep.subr.mxu0 0.0
  %116 = vmatpush1.msra.mxu0 0.0
  %117 = vmatprep.subr.mxu0 0.0
  %118 = vmatpush1.msra.mxu0 0.0
  %119 = vmatprep.subr.mxu0 0.0
  %120 = vmatpush1.msra.mxu0 0.0
  %121 = vmatprep.subr.mxu0 0.0
  %122 = vmatpush1.msra.mxu0 0.0
  %123 = vmatprep.subr.mxu0 %v19
  %124 = vmatpush1.msra.mxu0 %v18
  %125 = vmatprep.subr.mxu0 %v15
  %126 = vmatpush1.msra.mxu0 %v14
  %127 = vmatprep.subr.mxu0 0.0
  %128 = vmatpush2.msra.mxu0 0.0
  %129 = vmatprep.subr.mxu0 0.0
  %130 = vmatpush2.msra.mxu0 0.0
  %131 = vmatprep.subr.mxu0 0.0
  %132 = vmatpush2.msra.mxu0 0.0
  %133 = vmatprep.subr.mxu0 0.0
  %134 = vmatpush2.msra.mxu0 0.0
  %135 = vmatprep.subr.mxu0 0.0
  %136 = vmatpush2.msra.mxu0 0.0
  %137 = vmatprep.subr.mxu0 0.0
  %138 = vmatpush2.msra.mxu0 0.0
  %139 = vmatprep.subr.mxu0 0.0
  %140 = vmatpush2.msra.mxu0 0.0
  %141 = vmatprep.subr.mxu0 0.0
  %142 = vmatpush2.msra.mxu0 0.0
  %143 = vmatprep.subr.mxu0 0.0
  %144 = vmatpush2.msra.mxu0 0.0
  %145 = vmatprep.subr.mxu0 0.0
  %146 = vmatpush2.msra.mxu0 0.0
  %147 = vmatprep.subr.mxu0 0.0
  %148 = vmatpush2.msra.mxu0 0.0
  %149 = vmatprep.subr.mxu0 0.0
  %150 = vmatpush2.msra.mxu0 0.0
  %151 = vmatprep.subr.mxu0 0.0
  %152 = vmatpush2.msra.mxu0 0.0
  %153 = vmatprep.subr.mxu0 0.0
  %154 = vmatpush2.msra.mxu0 0.0
  %155 = vmatprep.subr.mxu0 0.0
  %156 = vmatpush2.msra.mxu0 0.0
  %157 = vmatprep.subr.mxu0 0.0
  %158 = vmatpush2.msra.mxu0 0.0
  %159 = vmatprep.mubr.f32.mxu0 0.0
  %160 = vmatmul.mubr.f32.gmra.mxu0 %v22
  %v161 = vpop.f32.mrf.mxu0
  %v162 = vadd.f32 0.0, %v161
  %v163 = vpop.f32.mrf.mxu0
  %v164 = vadd.f32 0.0, %v163
  %165 = vdwg.mxu0
  %166 = vst [vmem:[%s2] sm:$0x3f] %v91
  %167 = vst [vmem:[%s2 + $0x8] sm:$0x3f] %v93
  %168 = vst [vmem:[%s2 + $0x10] sm:$0x3f] %v162
  %169 = vst [vmem:[%s2 + $0x18] sm:$0x3f] %v164
  // Predicated region
  $region10: #{forward.1} parent=0 // pred_check
    _
  $region11: #{forward.1} parent=0 // pred_check_branch
    %171 = sbr.rel (0) target = $region13
  $region12: #{forward.1} parent=0 // pred_region
    _
  $region13: #{forward.1} parent=0 // pred_fallthru
    _
  // Predicated region
  $region14: #{forward.1} parent=0 // pred_check
    _
  $region15: #{forward.1} parent=0 // pred_check_branch
    %173 = sbr.rel (0) target = $region17
  $region16: #{forward.1} parent=0 // pred_region
    _
  $region17: #{forward.1} parent=0 // pred_fallthru
    _

</llo_original>
